<compile_context>
chip_gen: v5e
topology: v5e:2x2
jax: 0.10.0
libtpu: 0.0.40
codegen_flags: <defaults>
</compile_context>

<pallas_src>
import functools
import numpy as np

import jax
import jax.numpy as jnp
from jax.experimental import pallas as pl
from jax.experimental.pallas import tpu as pltpu

BN_EPS = 1e-5


def _round_up(x, m):
    return ((x + m - 1) // m) * m


def _pad_to(x, m, axis):
    pad = (-x.shape[axis]) % m
    if pad == 0:
        return x
    widths = [(0, 0)] * x.ndim
    widths[axis] = (0, pad)
    return jnp.pad(x, widths)


# ----------------------------------------------------------------------------
# Pallas kernels
# ----------------------------------------------------------------------------
def _matmul_kernel(a_ref, b_ref, bias_ref, *rest, relu, has_residual):
    # args: a, b, bias, [residual], out, acc_scratch
    if has_residual:
        res_ref, o_ref, acc_ref = rest
    else:
        o_ref, acc_ref = rest

    @pl.when(pl.program_id(2) == 0)
    def _():
        acc_ref[...] = jnp.zeros_like(acc_ref)

    acc_ref[...] += jnp.dot(a_ref[...], b_ref[...],
                            preferred_element_type=jnp.float32)

    @pl.when(pl.program_id(2) == pl.num_programs(2) - 1)
    def _():
        r = acc_ref[...] + bias_ref[...].astype(jnp.float32)
        if has_residual:
            r = r + res_ref[...].astype(jnp.float32)
        if relu:
            r = jnp.maximum(r, 0.0)
        o_ref[...] = r.astype(o_ref.dtype)


def _max9_kernel(*refs):
    # 9 inputs (TR, C) + 1 output (TR, C): elementwise max over the 9 pooling taps.
    o_ref = refs[-1]
    acc = refs[0][...]
    for r in refs[1:-1]:
        acc = jnp.maximum(acc, r[...])
    o_ref[...] = acc


def _adaptive_pool_kernel(coeff_ref, x_ref, o_ref):
    # coeff: (out*out, KP) f32 exact pooling weights, x: (1, KP, TC) bf16
    x = x_ref[0].astype(jnp.float32)
    o_ref[0] = jnp.dot(coeff_ref[...], x, preferred_element_type=jnp.float32)


# ----------------------------------------------------------------------------
# Pallas wrappers
# ----------------------------------------------------------------------------
@functools.partial(jax.jit, static_argnames=("relu", "out_dtype"))
def matmul_bias_act(a, b, bias, residual=None, relu=False,
                    out_dtype=jnp.bfloat16):
    """act(a @ b + bias [+ residual]).

    a: (M, K) bf16 patches; b: (Kp, Np) bf16 weights pre-padded to 128 multiples;
    bias: (Np,) f32; residual (optional): (M, Np) bf16 added in the epilogue.
    Returns (M, Np) in out_dtype.
    """
    M, _ = a.shape
    Kp, Np = b.shape

    a_p = _pad_to(a, 128, 1)
    assert a_p.shape[1] == Kp, (a_p.shape, b.shape)
    if residual is not None:
        assert residual.shape == (M, Np), (residual.shape, (M, Np))

    # --- tile selection -----------------------------------------------------
    TN = 256 if Np % 256 == 0 else 128
    if Kp <= 1024:
        TK = Kp
    else:
        TK = next(t for t in (512, 384, 256, 128) if Kp % t == 0)
    TM = min(256, _round_up(M, 8))
    # keep >=2 output blocks when possible so both v7x TensorCores get work
    if (_round_up(M, TM) // TM) * (Np // TN) == 1 and TM >= 16 and (TM // 2) % 8 == 0:
        TM //= 2
    Mp = _round_up(M, TM)

    a_p = _pad_to(a_p, TM, 0)
    bias2 = bias.reshape(1, -1)

    in_specs = [
        pl.BlockSpec((TM, TK), lambda i, j, k: (i, k)),
        pl.BlockSpec((TK, TN), lambda i, j, k: (k, j)),
        pl.BlockSpec((1, TN), lambda i, j, k: (0, j)),
    ]
    args = [a_p, b, bias2]
    if residual is not None:
        in_specs.append(pl.BlockSpec((TM, TN), lambda i, j, k: (i, j)))
        args.append(_pad_to(residual, TM, 0))

    grid = (Mp // TM, Np // TN, Kp // TK)

    out = pl.pallas_call(
        functools.partial(_matmul_kernel, relu=relu,
                          has_residual=residual is not None),
        out_shape=jax.ShapeDtypeStruct((Mp, Np), out_dtype),
        grid_spec=pltpu.PrefetchScalarGridSpec(
            num_scalar_prefetch=0,
            grid=grid,
            in_specs=in_specs,
            out_specs=pl.BlockSpec((TM, TN), lambda i, j, k: (i, j)),
            scratch_shapes=[pltpu.VMEM((TM, TN), jnp.float32)],
        ),
        compiler_params=pltpu.CompilerParams(
            dimension_semantics=("parallel", "parallel", "arbitrary")),
    )(*args)
    return out[:M]


@jax.jit
def maxpool_3x3_s2_p1(x):
    """MaxPool2d(kernel=3, stride=2, padding=1) on NHWC (bf16)."""
    N, H, W, C = x.shape
    xp = jnp.pad(x, ((0, 0), (1, 1), (1, 1), (0, 0)),
                 constant_values=-jnp.inf)
    Ho = (H + 2 - 3) // 2 + 1
    Wo = (W + 2 - 3) // 2 + 1
    M = N * Ho * Wo

    taps = [xp[:, di:di + 2 * Ho - 1:2, dj:dj + 2 * Wo - 1:2, :].reshape(M, C)
            for di in range(3) for dj in range(3)]

    TR = min(256, _round_up(M, 8))
    Mp = _round_up(M, TR)
    taps = [_pad_to(t, TR, 0) for t in taps]

    out = pl.pallas_call(
        _max9_kernel,
        out_shape=jax.ShapeDtypeStruct((Mp, C), x.dtype),
        grid=(Mp // TR,),
        in_specs=[pl.BlockSpec((TR, C), lambda i: (i, 0))] * 9,
        out_specs=pl.BlockSpec((TR, C), lambda i: (i, 0)),
        compiler_params=pltpu.CompilerParams(
            dimension_semantics=("parallel",)),
    )(*taps)
    return out[:M].reshape(N, Ho, Wo, C)


def _pool_matrix(in_size, out_size):
    # Exact AdaptiveAvgPool2d window arithmetic (PyTorch semantics).
    P = np.zeros((out_size, in_size), np.float32)
    for i in range(out_size):
        start = (i * in_size) // out_size
        end = -(-((i + 1) * in_size) // out_size)
        P[i, start:end] = 1.0 / (end - start)
    return P


@functools.partial(jax.jit, static_argnames=("out_size",))
def adaptive_avg_pool(x, out_size):
    """AdaptiveAvgPool2d((out_size, out_size)) on NHWC -> f32 NHWC."""
    N, H, W, C = x.shape
    Ph = _pool_matrix(H, out_size)
    Pw = _pool_matrix(W, out_size)
    coeff = np.kron(Ph, Pw)                       # (out*out, H*W)
    OO = out_size * out_size
    KP = _round_up(H * W, 128)                    # one lane width minimum
    coeff_p = np.zeros((OO, KP), np.float32)
    coeff_p[:, :H * W] = coeff
    coeff_j = jnp.asarray(coeff_p)

    xf = _pad_to(x.reshape(N, H * W, C), 128, 1)  # (N, KP, C)

    if C % 256 == 0:
        TC = 256
    elif C % 128 == 0:
        TC = 128
    else:
        TC = C

    out = pl.pallas_call(
        _adaptive_pool_kernel,
        out_shape=jax.ShapeDtypeStruct((N, OO, C), jnp.float32),
        grid=(N, C // TC),
        in_specs=[pl.BlockSpec((OO, KP), lambda n, c: (0, 0)),
                  pl.BlockSpec((1, KP, TC), lambda n, c: (n, 0, c))],
        out_specs=pl.BlockSpec((1, OO, TC), lambda n, c: (n, 0, c)),
        compiler_params=pltpu.CompilerParams(
            dimension_semantics=("parallel", "parallel")),
    )(coeff_j, xf)
    return out.reshape(N, out_size, out_size, C)


# ----------------------------------------------------------------------------
# ResNet-101 building blocks (glue: im2col / reshapes; matmuls run in Pallas)
# ----------------------------------------------------------------------------
def _im2col(x, k, stride, pad):
    N, H, W, C = x.shape
    if pad:
        x = jnp.pad(x, ((0, 0), (pad, pad), (pad, pad), (0, 0)))
    Hp, Wp = x.shape[1], x.shape[2]
    Ho = (Hp - k) // stride + 1
    Wo = (Wp - k) // stride + 1
    cols = []
    for di in range(k):
        for dj in range(k):
            cols.append(x[:, di:di + stride * (Ho - 1) + 1:stride,
                          dj:dj + stride * (Wo - 1) + 1:stride, :])
    patches = cols[0] if k == 1 else jnp.concatenate(cols, axis=-1)
    return patches.reshape(N * Ho * Wo, k * k * C), (N, Ho, Wo)


def conv_bn(x, p, stride, pad, relu, residual=None):
    patches, (N, Ho, Wo) = _im2col(x, p["k"], stride, pad)
    res = None
    if residual is not None:
        res = residual.reshape(N * Ho * Wo, -1)
    out = matmul_bias_act(patches, p["w"], p["b"], residual=res, relu=relu)
    return out.reshape(N, Ho, Wo, -1)


def bottleneck(x, blk, stride):
    if "downsample" in blk:
        identity = conv_bn(x, blk["downsample"], stride, 0, relu=False)
    else:
        identity = x
    out = conv_bn(x, blk["conv1"], 1, 0, relu=True)
    out = conv_bn(out, blk["conv2"], stride, 1, relu=True)
    # conv3 with the residual add + ReLU fused into the matmul epilogue
    out = conv_bn(out, blk["conv3"], 1, 0, relu=True, residual=identity)
    return out


# ----------------------------------------------------------------------------
# Deterministic parameter construction (BN folded, pre-padded, bf16 weights)
# ----------------------------------------------------------------------------
_rng = np.random.default_rng(0)


def make_conv_bn(cin, cout, k, cin_real=None, cout_real=None):
    """Conv(k) + folded eval-mode BN.  `cin`/`cout` are the channel counts as seen
    by the kernels (possibly zero-padded to 128); `*_real` are the true ResNet ones."""
    cin_real = cin if cin_real is None else cin_real
    cout_real = cout if cout_real is None else cout_real
    fan_in = cin_real * k * k
    w = np.zeros((k, k, cin, cout), np.float32)
    w[:, :, :cin_real, :cout_real] = _rng.normal(
        0.0, np.sqrt(2.0 / fan_in),
        size=(k, k, cin_real, cout_real)).astype(np.float32)
    gamma = np.ones((cout,), np.float32)
    beta = np.zeros((cout,), np.float32)
    mean = np.zeros((cout,), np.float32)
    var = np.ones((cout,), np.float32)
    scale = gamma / np.sqrt(var + BN_EPS)
    w_mat = (w * scale).reshape(k * k * cin, cout)
    b = beta - mean * scale
    # pre-pad K / N to multiples of 128 once, at parameter-build time
    Kp = _round_up(k * k * cin, 128)
    Np = _round_up(cout, 128)
    w_pad = np.zeros((Kp, Np), np.float32)
    w_pad[:k * k * cin, :cout] = w_mat
    b_pad = np.zeros((Np,), np.float32)
    b_pad[:cout] = b
    return {"w": jnp.asarray(w_pad, dtype=jnp.bfloat16),
            "b": jnp.asarray(b_pad),
            "k": k}


def make_bottleneck(cin, mid, cout, downsample, cin_real=None, mid_real=None):
    blk = {"conv1": make_conv_bn(cin, mid, 1, cin_real=cin_real, cout_real=mid_real),
           "conv2": make_conv_bn(mid, mid, 3, cin_real=mid_real, cout_real=mid_real),
           "conv3": make_conv_bn(mid, cout, 1, cin_real=mid_real)}
    if downsample:
        blk["downsample"] = make_conv_bn(cin, cout, 1, cin_real=cin_real)
    return blk


def make_resnet101_params():
    # Stem output carries its 64 real channels zero-padded to 128 (lane-dense,
    # no per-call pad/slice copies).  Same for layer1's 64-wide bottleneck mids.
    params = {"stem": make_conv_bn(3, 128, 7, cout_real=64), "layers": []}
    cfg = [(64, 256, 3, 1), (128, 512, 4, 2), (256, 1024, 23, 2), (512, 2048, 3, 2)]
    cin, cin_real = 128, 64
    for mid, cout, nblocks, stride in cfg:
        mid_seen = _round_up(mid, 128)
        mid_real = mid if mid != mid_seen else None
        layer = []
        for bi in range(nblocks):
            s = stride if bi == 0 else 1
            blk = make_bottleneck(
                cin if bi == 0 else cout, mid_seen, cout,
                downsample=(bi == 0),
                cin_real=(cin_real if bi == 0 else None),
                mid_real=mid_real)
            layer.append({"block": blk, "stride": s})
        params["layers"].append(layer)
        cin, cin_real = cout, cout
    return params


# ----------------------------------------------------------------------------
# Encoder forward
# ----------------------------------------------------------------------------
def encoder_forward(images_nchw, params, encoded_image_size=14):
    x = jnp.transpose(images_nchw, (0, 2, 3, 1)).astype(jnp.bfloat16)  # NCHW -> NHWC
    x = conv_bn(x, params["stem"], stride=2, pad=3, relu=True)         # 7x7/2 conv+BN+ReLU
    x = maxpool_3x3_s2_p1(x)                                           # maxpool 3x3/2
    for layer in params["layers"]:                                     # layer1..layer4
        for blk in layer:
            x = bottleneck(x, blk["block"], blk["stride"])
    x = adaptive_avg_pool(x, encoded_image_size)                       # AdaptiveAvgPool2d
    return x  # (N, 14, 14, 2048) float32 == out.permute(0, 2, 3, 1)


if __name__ == "__main__":
    params = make_resnet101_params()

    key = jax.random.PRNGKey(0)
    images = jax.random.normal(key, (2, 3, 64, 64), dtype=jnp.float32)

    out = encoder_forward(images, params, encoded_image_size=14)
    out = jax.block_until_ready(out)

    assert out.shape == (2, 14, 14, 2048), out.shape
    assert out.dtype == jnp.float32, out.dtype
    assert bool(jnp.all(jnp.isfinite(out)))
    print("KERNEL_OK")
</pallas_src>

<mosaic_0001>
module attributes {stable_mosaic.version = 11 : i64} {
  func.func @_matmul_kernel(%arg0: i32, %arg1: i32, %arg2: i32, %arg3: memref<256x256xbf16, #tpu.memory_space<vmem>>, %arg4: memref<256x128xbf16, #tpu.memory_space<vmem>>, %arg5: memref<1x128xf32, #tpu.memory_space<vmem>>, %arg6: memref<256x128xbf16, #tpu.memory_space<vmem>>, %arg7: memref<256x128xf32, #tpu.memory_space<vmem>>) attributes {dimension_semantics = [#tpu.dimension_semantics<parallel>, #tpu.dimension_semantics<parallel>, #tpu.dimension_semantics<arbitrary>], iteration_bounds = array<i64: 8, 1, 1>, scalar_prefetch = 0 : i64, scratch_operands = 1 : i64, tpu.core_type = #tpu.core_type<tc>, window_params = [{transform_indices = @transform_0, window_bounds = array<i64: 256, 256>}, {transform_indices = @transform_1, window_bounds = array<i64: 256, 128>}, {transform_indices = @transform_2, window_bounds = array<i64: 1, 128>}, {transform_indices = @transform_3, window_bounds = array<i64: 256, 128>}]} {
    %c0_i32 = arith.constant 0 : i32
    %0 = arith.cmpi eq, %arg2, %c0_i32 : i32
    %1 = arith.extui %0 : i1 to i32
    %c0_i32_0 = arith.constant 0 : i32
    %2 = arith.cmpi ne, %1, %c0_i32_0 : i32
    scf.if %2 {
      %cst_10 = arith.constant 0.000000e+00 : f32
      %12 = vector.broadcast %cst_10 : f32 to vector<256x128xf32>
      %c0_11 = arith.constant 0 : index
      %c0_12 = arith.constant 0 : index
      %13 = vector.load %arg7[%c0_11, %c0_12] : memref<256x128xf32, #tpu.memory_space<vmem>>, vector<256x128xf32>
      tpu.vector_store %arg7[%c0_11, %c0_12], %12 {strides = array<i32>} : memref<256x128xf32, #tpu.memory_space<vmem>>, vector<256x128xf32>,
    } else {
    }
    %c0 = arith.constant 0 : index
    %c0_1 = arith.constant 0 : index
    %3 = vector.load %arg7[%c0, %c0_1] : memref<256x128xf32, #tpu.memory_space<vmem>>, vector<256x128xf32>
    %c0_2 = arith.constant 0 : index
    %c0_3 = arith.constant 0 : index
    %4 = vector.load %arg3[%c0_2, %c0_3] : memref<256x256xbf16, #tpu.memory_space<vmem>>, vector<256x256xbf16>
    %c0_4 = arith.constant 0 : index
    %c0_5 = arith.constant 0 : index
    %5 = vector.load %arg4[%c0_4, %c0_5] : memref<256x128xbf16, #tpu.memory_space<vmem>>, vector<256x128xbf16>
    %cst = arith.constant dense<0.000000e+00> : vector<256x128xf32>
    %6 = tpu.matmul %4, %5, %cst {dimension_numbers = #tpu.dot_dimension_numbers<[1], [0], [0], [1], [0, 0, 1, 1], [], []>} : vector<256x256xbf16>, vector<256x128xbf16>, vector<256x128xf32> -> vector<256x128xf32>
    %7 = arith.addf %3, %6 : vector<256x128xf32>
    %c0_6 = arith.constant 0 : index
    %c0_7 = arith.constant 0 : index
    %8 = vector.load %arg7[%c0_6, %c0_7] : memref<256x128xf32, #tpu.memory_space<vmem>>, vector<256x128xf32>
    tpu.vector_store %arg7[%c0_6, %c0_7], %7 {strides = array<i32>} : memref<256x128xf32, #tpu.memory_space<vmem>>, vector<256x128xf32>,
    %c0_i32_8 = arith.constant 0 : i32
    %9 = arith.cmpi eq, %arg2, %c0_i32_8 : i32
    %10 = arith.extui %9 : i1 to i32
    %c0_i32_9 = arith.constant 0 : i32
    %11 = arith.cmpi ne, %10, %c0_i32_9 : i32
    scf.if %11 {
      %c0_10 = arith.constant 0 : index
      %c0_11 = arith.constant 0 : index
      %12 = vector.load %arg7[%c0_10, %c0_11] : memref<256x128xf32, #tpu.memory_space<vmem>>, vector<256x128xf32>
      %c0_12 = arith.constant 0 : index
      %c0_13 = arith.constant 0 : index
      %13 = vector.load %arg5[%c0_12, %c0_13] : memref<1x128xf32, #tpu.memory_space<vmem>>, vector<1x128xf32>
      %14 = vector.broadcast %13 : vector<1x128xf32> to vector<256x128xf32>
      %15 = arith.addf %12, %14 : vector<256x128xf32>
      %cst_14 = arith.constant 0.000000e+00 : f32
      %16 = vector.broadcast %cst_14 : f32 to vector<256x128xf32>
      %17 = arith.maximumf %15, %16 : vector<256x128xf32>
      %18 = arith.truncf %17 : vector<256x128xf32> to vector<256x128xbf16>
      %c0_15 = arith.constant 0 : index
      %c0_16 = arith.constant 0 : index
      %19 = vector.load %arg6[%c0_15, %c0_16] : memref<256x128xbf16, #tpu.memory_space<vmem>>, vector<256x128xbf16>
      tpu.vector_store %arg6[%c0_15, %c0_16], %18 {strides = array<i32>} : memref<256x128xbf16, #tpu.memory_space<vmem>>, vector<256x128xbf16>,
    } else {
    }
    return
  }
  func.func @transform_0(%arg0: i32, %arg1: i32, %arg2: i32) -> (i32, i32) {
    %c0_i32 = arith.constant 0 : i32
    return %arg0, %arg2 : i32, i32
  }
  func.func @transform_1(%arg0: i32, %arg1: i32, %arg2: i32) -> (i32, i32) {
    %c0_i32 = arith.constant 0 : i32
    return %arg2, %arg1 : i32, i32
  }
  func.func @transform_2(%arg0: i32, %arg1: i32, %arg2: i32) -> (i32, i32) {
    %c0_i32 = arith.constant 0 : i32
    %c0_i32_0 = arith.constant 0 : i32
    return %c0_i32, %arg1 : i32, i32
  }
  func.func @transform_3(%arg0: i32, %arg1: i32, %arg2: i32) -> (i32, i32) {
    %c0_i32 = arith.constant 0 : i32
    return %arg0, %arg1 : i32, i32
  }
}

</mosaic_0001>

<llo_original>
// kernel: matmul_bias_act.1
$region0: #{matmul_bias_act.1}
  #allocation0 [shape = 'u32[]', space=smem, size = 0x4, offset = 0x4, fixed_abs, tag = 'smem constant byte address 0x4 - core index']
  #allocation1 [shape = 'u32[72,128]{1,0:T(1,128)}', space=vmem, size = 0x9000, scoped, tag = 'internal scratch']
  #allocation2 [shape = 'f32[256,128]{1,0:T(8,128)}', space=vmem, size = 0x20000, scoped, tag = 'scratch operand']
  %s0 = inlined_call_operand.vmem [shape: bf16[2048,256], index: 0, kind: input, shape index: {}]
  %s1 = inlined_call_operand.vmem [shape: bf16[256,128], index: 1, kind: input, shape index: {}]
  %s2 = inlined_call_operand.vmem [shape: f32[1,128], index: 2, kind: input, shape index: {}]
  %s3 = inlined_call_operand.hbm [shape: bf16[2048,128], index: 3, kind: output, shape index: {}]
  %s4 = sld [smem:[#allocation0]]
  $region53: #{matmul_bias_act.1} parent=0
    _
  %s6 = ssub.s32 1, %s4
  %s7 = scalar_select 0, %s6, %s4
  $region1: #{matmul_bias_act.1} parent=0
    #allocation3 [shape = 'u8[131072]{0}', space=vmem, size = 0x20000, scoped, tag = 'output window, operand 0']
    #allocation4 [shape = 's32[2]{0}', space=sflag, size = 0x8, scoped, tag = 'scoped memory for matmul_bias_act.1']
    %8 = vsyncpa [#allocation4], 0
    %s9 = scalar_lea.sflag [#allocation4], 1
    %10 = vsyncpa %s9, 0
    loop: start=0, step=1, limit=10
    $region2: #{matmul_bias_act.1} parent=1 // loop_pre_header
      _
    $region3: #{matmul_bias_act.1} parent=1 // loop_header
      %s12 = sphi 0, %s16
      %p13 = scmp.ge.s32.totalorder %s12, 10
      %s19 = sphi 0, %s38
      %s20 = sphi 0, %s34
      %s21 = sphi 0, %s30
      %s22 = sphi 0, %s19
      %s23 = sphi 0, %s20
      %s24 = sphi 0, %s21
      %s25 = sphi 0, %s22
      %s26 = sphi 0, %s23
      %s27 = sphi 0, %s24
      %s43 = sphi 0, %s45
      %s46 = sphi 0, %s43
      %s47 = sphi 0, %s46
      %s63 = sphi 0, %s47
      %s71 = sphi 0, %s73
      %s74 = sphi 0, %s71
      %s75 = sphi 0, %s74
      %s91 = sphi 0, %s75
      %s97 = sphi 0, %s99
      %s100 = sphi 0, %s97
      %s101 = sphi 0, %s100
      %s117 = sphi 0, %s101
      %s125 = sphi 0, %s127
      %s128 = sphi 0, %s125
      %s129 = sphi 0, %s128
      %s145 = sphi 0, %s129
    $region4: #{matmul_bias_act.1} parent=1 // loop_header_branch
      %15 = sbr.rel (%p13) target = $region8
    $region5: #{matmul_bias_act.1} parent=1 // loop_body
      %s17 = ssub.s32 %s12, 1
      %s18 = ssub.s32 %s12, 2
      %s28 = sadd.s32 1, %s21
      %p29 = scmp.ge.s32.totalorder %s28, 1
      %s30 = scalar_select %p29, 0, %s28
      %s31 = sadd.s32 1, %s20
      %s32 = scalar_select %p29, %s31, %s20
      %p33 = scmp.ge.s32.totalorder %s32, 1
      %s34 = scalar_select %p33, 0, %s32
      %s35 = sadd.s32 1, %s19
      %s36 = scalar_select %p33, %s35, %s19
      %p37 = scmp.ge.s32.totalorder %s36, 8
      %s38 = scalar_select %p37, 0, %s36
      %s39 = ssub.s32 %s19, %s38
      %s40 = ssub.s32 %s21, %s30
      %s41 = sor.u32 %s39, %s40
      %p42 = scmp.eq.s32.totalorder %s41, 0
      %s44 = sadd.s32 %s43, 1
      %s45 = scalar_select %p42, %s43, %s44
      %p48 = pneg %p42
      %p49 = scmp.eq.s32.totalorder %s12, 7
      %p50 = por %p48, %p49
      %p51 = scmp.ne.s32.totalorder %s43, %s46
      %p52 = scmp.eq.s32.totalorder %s12, 0
      %p53 = por %p51, %p52
      %p54 = scmp.ne.s32.totalorder %s43, %s46
      %p55 = scmp.eq.s32.totalorder %s17, 7
      %p56 = por %p54, %p55
      %p57 = scmp.ne.s32.totalorder %s46, %s47
      %p58 = scmp.eq.s32.totalorder %s17, 0
      %p59 = por %p57, %p58
      %p60 = scmp.ne.s32.totalorder %s46, %s47
      %p61 = scmp.eq.s32.totalorder %s18, 7
      %p62 = por %p60, %p61
      %p64 = scmp.ne.s32.totalorder %s47, %s63
      %p65 = scmp.eq.s32.totalorder %s18, 0
      %p66 = por %p64, %p65
      %s67 = ssub.s32 %s21, %s30
      %s68 = ssub.s32 %s20, %s34
      %s69 = sor.u32 %s67, %s68
      %p70 = scmp.eq.s32.totalorder %s69, 0
      %s72 = sadd.s32 %s71, 1
      %s73 = scalar_select %p70, %s71, %s72
      %p76 = pneg %p70
      %p77 = scmp.eq.s32.totalorder %s12, 7
      %p78 = por %p76, %p77
      %p79 = scmp.ne.s32.totalorder %s71, %s74
      %p80 = scmp.eq.s32.totalorder %s12, 0
      %p81 = por %p79, %p80
      %p82 = scmp.ne.s32.totalorder %s71, %s74
      %p83 = scmp.eq.s32.totalorder %s17, 7
      %p84 = por %p82, %p83
      %p85 = scmp.ne.s32.totalorder %s74, %s75
      %p86 = scmp.eq.s32.totalorder %s17, 0
      %p87 = por %p85, %p86
      %p88 = scmp.ne.s32.totalorder %s74, %s75
      %p89 = scmp.eq.s32.totalorder %s18, 7
      %p90 = por %p88, %p89
      %p92 = scmp.ne.s32.totalorder %s75, %s91
      %p93 = scmp.eq.s32.totalorder %s18, 0
      %p94 = por %p92, %p93
      %s95 = ssub.s32 %s20, %s34
      %p96 = scmp.eq.s32.totalorder %s95, 0
      %s98 = sadd.s32 %s97, 1
      %s99 = scalar_select %p96, %s97, %s98
      %p102 = pneg %p96
      %p103 = scmp.eq.s32.totalorder %s12, 7
      %p104 = por %p102, %p103
      %p105 = scmp.ne.s32.totalorder %s97, %s100
      %p106 = scmp.eq.s32.totalorder %s12, 0
      %p107 = por %p105, %p106
      %p108 = scmp.ne.s32.totalorder %s97, %s100
      %p109 = scmp.eq.s32.totalorder %s17, 7
      %p110 = por %p108, %p109
      %p111 = scmp.ne.s32.totalorder %s100, %s101
      %p112 = scmp.eq.s32.totalorder %s17, 0
      %p113 = por %p111, %p112
      %p114 = scmp.ne.s32.totalorder %s100, %s101
      %p115 = scmp.eq.s32.totalorder %s18, 7
      %p116 = por %p114, %p115
      %p118 = scmp.ne.s32.totalorder %s101, %s117
      %p119 = scmp.eq.s32.totalorder %s18, 0
      %p120 = por %p118, %p119
      %s121 = ssub.s32 %s19, %s38
      %s122 = ssub.s32 %s20, %s34
      %s123 = sor.u32 %s121, %s122
      %p124 = scmp.eq.s32.totalorder %s123, 0
      %s126 = sadd.s32 %s125, 1
      %s127 = scalar_select %p124, %s125, %s126
      %p130 = pneg %p124
      %p131 = scmp.eq.s32.totalorder %s12, 7
      %p132 = por %p130, %p131
      %p133 = scmp.ne.s32.totalorder %s125, %s128
      %p134 = scmp.eq.s32.totalorder %s12, 0
      %p135 = por %p133, %p134
      %p136 = scmp.ne.s32.totalorder %s125, %s128
      %p137 = scmp.eq.s32.totalorder %s17, 7
      %p138 = por %p136, %p137
      %p139 = scmp.ne.s32.totalorder %s128, %s129
      %p140 = scmp.eq.s32.totalorder %s17, 0
      %p141 = por %p139, %p140
      %p142 = scmp.ne.s32.totalorder %s128, %s129
      %p143 = scmp.eq.s32.totalorder %s18, 7
      %p144 = por %p142, %p143
      %p146 = scmp.ne.s32.totalorder %s129, %s145
      %p147 = scmp.eq.s32.totalorder %s18, 0
      %p148 = por %p146, %p147
      %p149 = scmp.le.s32.totalorder 1, %s12
      %p150 = scmp.lt.s32.totalorder %s12, 9
      %p151 = pnand %p149, %p150
      %p152 = pneg %p151
      // Predicated region
      $region9: #{matmul_bias_act.1} parent=5 // pred_check
        _
      $region10: #{matmul_bias_act.1} parent=5 // pred_check_branch
        %154 = sbr.rel (%p151) target = $region12
      $region11: #{matmul_bias_act.1} parent=5 // pred_region
        %s155 = ssub.s32 %s12, 1
        // Predicated region
        $region13: #{matmul_bias_act.1} parent=11 // pred_check
          %p156 = pneg %p87
        $region14: #{matmul_bias_act.1} parent=11 // pred_check_branch
          %158 = sbr.rel (%p156) target = $region16
        $region15: #{matmul_bias_act.1} parent=11 // pred_region
          %s159 = smul.u32 32, %s24
          %p160 = scmp.lt.s32.totalorder %s159, 31
          %s161 = scalar_select %p160, %s159, 31
          %p162 = scmp.lt.s32.totalorder %s23, 0
          %s163 = scalar_select %p162, %s23, 0
          %s164 = sadd.s32 %s163, %s161
          %s165 = smul.addr %s164, 4
          %s166 = scalar_lea.vmem %s1, %s165
          %s167 = smul.u32 32, %s24
        $region16: #{matmul_bias_act.1} parent=11 // pred_fallthru
          _
        // Predicated region
        $region17: #{matmul_bias_act.1} parent=11 // pred_check
          %p168 = pneg %p113
        $region18: #{matmul_bias_act.1} parent=11 // pred_check_branch
          %170 = sbr.rel (%p168) target = $region20
        $region19: #{matmul_bias_act.1} parent=11 // pred_region
          %p171 = scmp.lt.s32.totalorder %s23, 0
          %s172 = scalar_select %p171, %s23, 0
          %s173 = scalar_lea.vmem %s2, %s172
        $region20: #{matmul_bias_act.1} parent=11 // pred_fallthru
          _
      $region12: #{matmul_bias_act.1} parent=5 // pred_fallthru
        _
      %p174 = scmp.lt.s32.totalorder %s12, 8
      // Predicated region
      $region21: #{matmul_bias_act.1} parent=5 // pred_check
        %p175 = pneg %p174
      $region22: #{matmul_bias_act.1} parent=5 // pred_check_branch
        %177 = sbr.rel (%p175) target = $region24
      $region23: #{matmul_bias_act.1} parent=5 // pred_region
        // Predicated region
        $region25: #{matmul_bias_act.1} parent=23 // pred_check
          %p178 = pneg %p53
        $region26: #{matmul_bias_act.1} parent=23 // pred_check_branch
          %180 = sbr.rel (%p178) target = $region28
        $region27: #{matmul_bias_act.1} parent=23 // pred_region
          %s181 = smul.u32 32, %s19
          %s182 = smul.u32 2, %s21
          %p183 = scmp.lt.s32.totalorder %s181, 255
          %s184 = scalar_select %p183, %s181, 255
          %p185 = scmp.lt.s32.totalorder %s182, 1
          %s186 = scalar_select %p185, %s182, 1
          %s187 = smul.addr %s184, 2
          %s188 = sadd.s32 %s186, %s187
          %s189 = smul.addr %s188, 4
          %s190 = scalar_lea.vmem %s0, %s189
          %s191 = smul.u32 32, %s19
          %s192 = smul.u32 2, %s21
        $region28: #{matmul_bias_act.1} parent=23 // pred_fallthru
          _
      $region24: #{matmul_bias_act.1} parent=5 // pred_fallthru
        _
      %p193 = scmp.le.s32.totalorder 1, %s12
      %p194 = scmp.lt.s32.totalorder %s12, 9
      %p195 = pnand %p193, %p194
      %p196 = pneg %p195
      // Predicated region
      $region29: #{matmul_bias_act.1} parent=5 // pred_check
        _
      $region30: #{matmul_bias_act.1} parent=5 // pred_check_branch
        %198 = sbr.rel (%p195) target = $region32
      $region31: #{matmul_bias_act.1} parent=5 // pred_region
        %s199 = ssub.s32 %s12, 1
        %s200 = smul.u32 32, %s22
        %s201 = smul.u32 2, %s24
        %p202 = scmp.lt.s32.totalorder %s200, 255
        %s203 = scalar_select %p202, %s200, 255
        %p204 = scmp.lt.s32.totalorder %s201, 1
        %s205 = scalar_select %p204, %s201, 1
        %s206 = smul.addr %s203, 2
        %s207 = sadd.s32 %s205, %s206
        %s208 = smul.addr %s207, 4
        %s209 = scalar_lea.vmem %s0, %s208
        %p210 = pneg %p59
        %p211 = pneg %p56
        %s212 = smul.u32 32, %s24
        %p213 = scmp.lt.s32.totalorder %s212, 31
        %s214 = scalar_select %p213, %s212, 31
        %p215 = scmp.lt.s32.totalorder %s23, 0
        %s216 = scalar_select %p215, %s23, 0
        %s217 = sadd.s32 %s216, %s214
        %s218 = smul.addr %s217, 4
        %s219 = scalar_lea.vmem %s1, %s218
        %p220 = pneg %p87
        %p221 = pneg %p84
        %p222 = scmp.lt.s32.totalorder %s23, 0
        %s223 = scalar_select %p222, %s23, 0
        %s224 = scalar_lea.vmem %s2, %s223
        %p225 = pneg %p113
        %p226 = pneg %p110
        %p227 = pneg %p141
        %p228 = pneg %p138
        %s229 = sand.u32 %s128, 1
        %s230 = scalar_lea.sflag [#allocation4], %s229
        %s231 = sand.u32 %s128, 1
        %s232 = smul.addr %s231, 128
        %s233 = scalar_lea.vmem [#allocation3], %s232
        %s234 = smul.u32 32, %s22
        %s235 = smul.u32 2, %s24
        %p236 = scmp.lt.s32.totalorder %s234, 255
        %s237 = scalar_select %p236, %s234, 255
        %p238 = scmp.lt.s32.totalorder %s235, 1
        %s239 = scalar_select %p238, %s235, 1
        %s240 = smul.addr %s237, 2
        %s241 = sadd.s32 %s239, %s240
        %s242 = smul.addr %s241, 4
        %s243 = scalar_lea.vmem %s0, %s242
        %s244 = smul.u32 32, %s22
        %s245 = smul.u32 2, %s24
        %s246 = smul.u32 32, %s24
        %p247 = scmp.lt.s32.totalorder %s246, 31
        %s248 = scalar_select %p247, %s246, 31
        %p249 = scmp.lt.s32.totalorder %s23, 0
        %s250 = scalar_select %p249, %s23, 0
        %s251 = sadd.s32 %s250, %s248
        %s252 = smul.addr %s251, 4
        %s253 = scalar_lea.vmem %s1, %s252
        %s254 = smul.u32 32, %s24
        %p255 = scmp.lt.s32.totalorder %s23, 0
        %s256 = scalar_select %p255, %s23, 0
        %s257 = scalar_lea.vmem %s2, %s256
        %s258 = smul.u32 32, %s22
        %p259 = scmp.eq.s32.totalorder %s24, 0
        // Predicated region
        $region33: #{matmul_bias_act.1} parent=31 // pred_check
          %p260 = pneg %p259
        $region34: #{matmul_bias_act.1} parent=31 // pred_check_branch
          %262 = sbr.rel (%p260) target = $region36
        $region35: #{matmul_bias_act.1} parent=31 // pred_region
          %263 = vst [vmem:[#allocation2] sm:$0xff] 0.0
          %264 = vst [vmem:[#allocation2 + $0x8] sm:$0xff] 0.0
          %265 = vst [vmem:[#allocation2 + $0x10] sm:$0xff] 0.0
          %266 = vst [vmem:[#allocation2 + $0x18] sm:$0xff] 0.0
          %267 = vst [vmem:[#allocation2 + $0x20] sm:$0xff] 0.0
          %268 = vst [vmem:[#allocation2 + $0x28] sm:$0xff] 0.0
          %269 = vst [vmem:[#allocation2 + $0x30] sm:$0xff] 0.0
          %270 = vst [vmem:[#allocation2 + $0x38] sm:$0xff] 0.0
          %271 = vst [vmem:[#allocation2 + $0x40] sm:$0xff] 0.0
          %272 = vst [vmem:[#allocation2 + $0x48] sm:$0xff] 0.0
          %273 = vst [vmem:[#allocation2 + $0x50] sm:$0xff] 0.0
          %274 = vst [vmem:[#allocation2 + $0x58] sm:$0xff] 0.0
          %275 = vst [vmem:[#allocation2 + $0x60] sm:$0xff] 0.0
          %276 = vst [vmem:[#allocation2 + $0x68] sm:$0xff] 0.0
          %277 = vst [vmem:[#allocation2 + $0x70] sm:$0xff] 0.0
          %278 = vst [vmem:[#allocation2 + $0x78] sm:$0xff] 0.0
          %279 = vst [vmem:[#allocation2 + $0x80] sm:$0xff] 0.0
          %280 = vst [vmem:[#allocation2 + $0x88] sm:$0xff] 0.0
          %281 = vst [vmem:[#allocation2 + $0x90] sm:$0xff] 0.0
          %282 = vst [vmem:[#allocation2 + $0x98] sm:$0xff] 0.0
          %283 = vst [vmem:[#allocation2 + $0xa0] sm:$0xff] 0.0
          %284 = vst [vmem:[#allocation2 + $0xa8] sm:$0xff] 0.0
          %285 = vst [vmem:[#allocation2 + $0xb0] sm:$0xff] 0.0
          %286 = vst [vmem:[#allocation2 + $0xb8] sm:$0xff] 0.0
          %287 = vst [vmem:[#allocation2 + $0xc0] sm:$0xff] 0.0
          %288 = vst [vmem:[#allocation2 + $0xc8] sm:$0xff] 0.0
          %289 = vst [vmem:[#allocation2 + $0xd0] sm:$0xff] 0.0
          %290 = vst [vmem:[#allocation2 + $0xd8] sm:$0xff] 0.0
          %291 = vst [vmem:[#allocation2 + $0xe0] sm:$0xff] 0.0
          %292 = vst [vmem:[#allocation2 + $0xe8] sm:$0xff] 0.0
          %293 = vst [vmem:[#allocation2 + $0xf0] sm:$0xff] 0.0
          %294 = vst [vmem:[#allocation2 + $0xf8] sm:$0xff] 0.0
        $region36: #{matmul_bias_act.1} parent=31 // pred_fallthru
          _
        %v295 = vld [vmem:[#allocation2] sm:$0xff]
        %v296 = vld [vmem:[#allocation2 + $0x8] sm:$0xff]
        %v297 = vld [vmem:[#allocation2 + $0x10] sm:$0xff]
        %v298 = vld [vmem:[#allocation2 + $0x18] sm:$0xff]
        %v299 = vld [vmem:[#allocation2 + $0x20] sm:$0xff]
        %v300 = vld [vmem:[#allocation2 + $0x28] sm:$0xff]
        %v301 = vld [vmem:[#allocation2 + $0x30] sm:$0xff]
        %v302 = vld [vmem:[#allocation2 + $0x38] sm:$0xff]
        %v303 = vld [vmem:[#allocation2 + $0x40] sm:$0xff]
        %v304 = vld [vmem:[#allocation2 + $0x48] sm:$0xff]
        %v305 = vld [vmem:[#allocation2 + $0x50] sm:$0xff]
        %v306 = vld [vmem:[#allocation2 + $0x58] sm:$0xff]
        %v307 = vld [vmem:[#allocation2 + $0x60] sm:$0xff]
        %v308 = vld [vmem:[#allocation2 + $0x68] sm:$0xff]
        %v309 = vld [vmem:[#allocation2 + $0x70] sm:$0xff]
        %v310 = vld [vmem:[#allocation2 + $0x78] sm:$0xff]
        %v311 = vld [vmem:[#allocation2 + $0x80] sm:$0xff]
        %v312 = vld [vmem:[#allocation2 + $0x88] sm:$0xff]
        %v313 = vld [vmem:[#allocation2 + $0x90] sm:$0xff]
        %v314 = vld [vmem:[#allocation2 + $0x98] sm:$0xff]
        %v315 = vld [vmem:[#allocation2 + $0xa0] sm:$0xff]
        %v316 = vld [vmem:[#allocation2 + $0xa8] sm:$0xff]
        %v317 = vld [vmem:[#allocation2 + $0xb0] sm:$0xff]
        %v318 = vld [vmem:[#allocation2 + $0xb8] sm:$0xff]
        %v319 = vld [vmem:[#allocation2 + $0xc0] sm:$0xff]
        %v320 = vld [vmem:[#allocation2 + $0xc8] sm:$0xff]
        %v321 = vld [vmem:[#allocation2 + $0xd0] sm:$0xff]
        %v322 = vld [vmem:[#allocation2 + $0xd8] sm:$0xff]
        %v323 = vld [vmem:[#allocation2 + $0xe0] sm:$0xff]
        %v324 = vld [vmem:[#allocation2 + $0xe8] sm:$0xff]
        %v325 = vld [vmem:[#allocation2 + $0xf0] sm:$0xff]
        %v326 = vld [vmem:[#allocation2 + $0xf8] sm:$0xff]
        %v327 = vld [vmem:[%s243] sm:$0xff]
        %v328 = vld [vmem:[%s243 + $0x8] sm:$0xff]
        %v329 = vld [vmem:[%s243 + $0x10] sm:$0xff]
        %v330 = vld [vmem:[%s243 + $0x18] sm:$0xff]
        %v331 = vld [vmem:[%s243 + $0x20] sm:$0xff]
        %v332 = vld [vmem:[%s243 + $0x28] sm:$0xff]
        %v333 = vld [vmem:[%s243 + $0x30] sm:$0xff]
        %v334 = vld [vmem:[%s243 + $0x38] sm:$0xff]
        %v335 = vld [vmem:[%s243 + $0x40] sm:$0xff]
        %v336 = vld [vmem:[%s243 + $0x48] sm:$0xff]
        %v337 = vld [vmem:[%s243 + $0x50] sm:$0xff]
        %v338 = vld [vmem:[%s243 + $0x58] sm:$0xff]
        %v339 = vld [vmem:[%s243 + $0x60] sm:$0xff]
        %v340 = vld [vmem:[%s243 + $0x68] sm:$0xff]
        %v341 = vld [vmem:[%s243 + $0x70] sm:$0xff]
        %v342 = vld [vmem:[%s243 + $0x78] sm:$0xff]
        %v343 = vld [vmem:[%s243 + $0x80] sm:$0xff]
        %v344 = vld [vmem:[%s243 + $0x88] sm:$0xff]
        %v345 = vld [vmem:[%s243 + $0x90] sm:$0xff]
        %v346 = vld [vmem:[%s243 + $0x98] sm:$0xff]
        %v347 = vld [vmem:[%s243 + $0xa0] sm:$0xff]
        %v348 = vld [vmem:[%s243 + $0xa8] sm:$0xff]
        %v349 = vld [vmem:[%s243 + $0xb0] sm:$0xff]
        %v350 = vld [vmem:[%s243 + $0xb8] sm:$0xff]
        %v351 = vld [vmem:[%s243 + $0xc0] sm:$0xff]
        %v352 = vld [vmem:[%s243 + $0xc8] sm:$0xff]
        %v353 = vld [vmem:[%s243 + $0xd0] sm:$0xff]
        %v354 = vld [vmem:[%s243 + $0xd8] sm:$0xff]
        %v355 = vld [vmem:[%s243 + $0xe0] sm:$0xff]
        %v356 = vld [vmem:[%s243 + $0xe8] sm:$0xff]
        %v357 = vld [vmem:[%s243 + $0xf0] sm:$0xff]
        %v358 = vld [vmem:[%s243 + $0xf8] sm:$0xff]
        %v359 = vld [vmem:[%s253] sm:$0xf]
        %v360 = vld [vmem:[%s253 + $0x4] sm:$0xf]
        %v361 = vld [vmem:[%s253 + $0x8] sm:$0xf]
        %v362 = vld [vmem:[%s253 + $0xc] sm:$0xf]
        %v363 = vld [vmem:[%s253 + $0x10] sm:$0xf]
        %v364 = vld [vmem:[%s253 + $0x14] sm:$0xf]
        %v365 = vld [vmem:[%s253 + $0x18] sm:$0xf]
        %v366 = vld [vmem:[%s253 + $0x1c] sm:$0xf]
        %v367 = vld [vmem:[%s253 + $0x20] sm:$0xf]
        %v368 = vld [vmem:[%s253 + $0x24] sm:$0xf]
        %v369 = vld [vmem:[%s253 + $0x28] sm:$0xf]
        %v370 = vld [vmem:[%s253 + $0x2c] sm:$0xf]
        %v371 = vld [vmem:[%s253 + $0x30] sm:$0xf]
        %v372 = vld [vmem:[%s253 + $0x34] sm:$0xf]
        %v373 = vld [vmem:[%s253 + $0x38] sm:$0xf]
        %v374 = vld [vmem:[%s253 + $0x3c] sm:$0xf]
        %v375 = vld [vmem:[%s253 + $0x40] sm:$0xf]
        %v376 = vld [vmem:[%s253 + $0x44] sm:$0xf]
        %v377 = vld [vmem:[%s253 + $0x48] sm:$0xf]
        %v378 = vld [vmem:[%s253 + $0x4c] sm:$0xf]
        %v379 = vld [vmem:[%s253 + $0x50] sm:$0xf]
        %v380 = vld [vmem:[%s253 + $0x54] sm:$0xf]
        %v381 = vld [vmem:[%s253 + $0x58] sm:$0xf]
        %v382 = vld [vmem:[%s253 + $0x5c] sm:$0xf]
        %v383 = vld [vmem:[%s253 + $0x60] sm:$0xf]
        %v384 = vld [vmem:[%s253 + $0x64] sm:$0xf]
        %v385 = vld [vmem:[%s253 + $0x68] sm:$0xf]
        %v386 = vld [vmem:[%s253 + $0x6c] sm:$0xf]
        %v387 = vld [vmem:[%s253 + $0x70] sm:$0xf]
        %v388 = vld [vmem:[%s253 + $0x74] sm:$0xf]
        %v389 = vld [vmem:[%s253 + $0x78] sm:$0xf]
        %v390 = vld [vmem:[%s253 + $0x7c] sm:$0xf]
        %v423 = vunpack.c.l.b16 %v327
        %v424 = vunpack.c.h.b16 %v327
        %v425 = vunpack.c.l.b16 %v328
        %v426 = vunpack.c.h.b16 %v328
        %v427 = vunpack.c.l.b16 %v329
        %v428 = vunpack.c.h.b16 %v329
        %v429 = vunpack.c.l.b16 %v330
        %v430 = vunpack.c.h.b16 %v330
        %v431 = vunpack.c.l.b16 %v331
        %v432 = vunpack.c.h.b16 %v331
        %v433 = vunpack.c.l.b16 %v332
        %v434 = vunpack.c.h.b16 %v332
        %v435 = vunpack.c.l.b16 %v333
        %v436 = vunpack.c.h.b16 %v333
        %v437 = vunpack.c.l.b16 %v334
        %v438 = vunpack.c.h.b16 %v334
        %v439 = vunpack.c.l.b16 %v335
        %v440 = vunpack.c.h.b16 %v335
        %v441 = vunpack.c.l.b16 %v336
        %v442 = vunpack.c.h.b16 %v336
        %v443 = vunpack.c.l.b16 %v337
        %v444 = vunpack.c.h.b16 %v337
        %v445 = vunpack.c.l.b16 %v338
        %v446 = vunpack.c.h.b16 %v338
        %v447 = vunpack.c.l.b16 %v339
        %v448 = vunpack.c.h.b16 %v339
        %v449 = vunpack.c.l.b16 %v340
        %v450 = vunpack.c.h.b16 %v340
        %v451 = vunpack.c.l.b16 %v341
        %v452 = vunpack.c.h.b16 %v341
        %v453 = vunpack.c.l.b16 %v342
        %v454 = vunpack.c.h.b16 %v342
        %v455 = vunpack.c.l.b16 %v343
        %v456 = vunpack.c.h.b16 %v343
        %v457 = vunpack.c.l.b16 %v344
        %v458 = vunpack.c.h.b16 %v344
        %v459 = vunpack.c.l.b16 %v345
        %v460 = vunpack.c.h.b16 %v345
        %v461 = vunpack.c.l.b16 %v346
        %v462 = vunpack.c.h.b16 %v346
        %v463 = vunpack.c.l.b16 %v347
        %v464 = vunpack.c.h.b16 %v347
        %v465 = vunpack.c.l.b16 %v348
        %v466 = vunpack.c.h.b16 %v348
        %v467 = vunpack.c.l.b16 %v349
        %v468 = vunpack.c.h.b16 %v349
        %v469 = vunpack.c.l.b16 %v350
        %v470 = vunpack.c.h.b16 %v350
        %v471 = vunpack.c.l.b16 %v351
        %v472 = vunpack.c.h.b16 %v351
        %v473 = vunpack.c.l.b16 %v352
        %v474 = vunpack.c.h.b16 %v352
        %v475 = vunpack.c.l.b16 %v353
        %v476 = vunpack.c.h.b16 %v353
        %v477 = vunpack.c.l.b16 %v354
        %v478 = vunpack.c.h.b16 %v354
        %v479 = vunpack.c.l.b16 %v355
        %v480 = vunpack.c.h.b16 %v355
        %v481 = vunpack.c.l.b16 %v356
        %v482 = vunpack.c.h.b16 %v356
        %v483 = vunpack.c.l.b16 %v357
        %v484 = vunpack.c.h.b16 %v357
        %v485 = vunpack.c.l.b16 %v358
        %v486 = vunpack.c.h.b16 %v358
        %v487 = vpack.c.b16 %v425, %v423
        %v488 = vpack.c.b16 %v426, %v424
        %v489 = vpack.c.b16 %v429, %v427
        %v490 = vpack.c.b16 %v430, %v428
        %v491 = vpack.c.b16 %v433, %v431
        %v492 = vpack.c.b16 %v434, %v432
        %v493 = vpack.c.b16 %v437, %v435
        %v494 = vpack.c.b16 %v438, %v436
        %v495 = vpack.c.b16 %v441, %v439
        %v496 = vpack.c.b16 %v442, %v440
        %v497 = vpack.c.b16 %v445, %v443
        %v498 = vpack.c.b16 %v446, %v444
        %v499 = vpack.c.b16 %v449, %v447
        %v500 = vpack.c.b16 %v450, %v448
        %v501 = vpack.c.b16 %v453, %v451
        %v502 = vpack.c.b16 %v454, %v452
        %v503 = vpack.c.b16 %v457, %v455
        %v504 = vpack.c.b16 %v458, %v456
        %v505 = vpack.c.b16 %v461, %v459
        %v506 = vpack.c.b16 %v462, %v460
        %v507 = vpack.c.b16 %v465, %v463
        %v508 = vpack.c.b16 %v466, %v464
        %v509 = vpack.c.b16 %v469, %v467
        %v510 = vpack.c.b16 %v470, %v468
        %v511 = vpack.c.b16 %v473, %v471
        %v512 = vpack.c.b16 %v474, %v472
        %v513 = vpack.c.b16 %v477, %v475
        %v514 = vpack.c.b16 %v478, %v476
        %v515 = vpack.c.b16 %v481, %v479
        %v516 = vpack.c.b16 %v482, %v480
        %v517 = vpack.c.b16 %v485, %v483
        %v518 = vpack.c.b16 %v486, %v484
        %v583 = vunpack.c.l.b16 %v359
        %v584 = vunpack.c.l.b16 %v360
        %v585 = vunpack.c.l.b16 %v361
        %v586 = vunpack.c.l.b16 %v362
        %v587 = vunpack.c.l.b16 %v363
        %v588 = vunpack.c.l.b16 %v364
        %v589 = vunpack.c.l.b16 %v365
        %v590 = vunpack.c.l.b16 %v366
        %v591 = vunpack.c.l.b16 %v367
        %v592 = vunpack.c.l.b16 %v368
        %v593 = vunpack.c.l.b16 %v369
        %v594 = vunpack.c.l.b16 %v370
        %v595 = vunpack.c.l.b16 %v371
        %v596 = vunpack.c.l.b16 %v372
        %v597 = vunpack.c.l.b16 %v373
        %v598 = vunpack.c.l.b16 %v374
        %v599 = vunpack.c.l.b16 %v375
        %v600 = vunpack.c.l.b16 %v376
        %v601 = vunpack.c.l.b16 %v377
        %v602 = vunpack.c.l.b16 %v378
        %v603 = vunpack.c.l.b16 %v379
        %v604 = vunpack.c.l.b16 %v380
        %v605 = vunpack.c.l.b16 %v381
        %v606 = vunpack.c.l.b16 %v382
        %v607 = vunpack.c.l.b16 %v383
        %v608 = vunpack.c.l.b16 %v384
        %v609 = vunpack.c.l.b16 %v385
        %v610 = vunpack.c.l.b16 %v386
        %v611 = vunpack.c.l.b16 %v387
        %v612 = vunpack.c.l.b16 %v388
        %v613 = vunpack.c.l.b16 %v389
        %v614 = vunpack.c.l.b16 %v390
        %v615 = vpack.c.b16 %v584, %v583
        %v616 = vpack.c.b16 %v586, %v585
        %v617 = vpack.c.b16 %v588, %v587
        %v618 = vpack.c.b16 %v590, %v589
        %v619 = vpack.c.b16 %v592, %v591
        %v620 = vpack.c.b16 %v594, %v593
        %v621 = vpack.c.b16 %v596, %v595
        %v622 = vpack.c.b16 %v598, %v597
        %v623 = vpack.c.b16 %v600, %v599
        %v624 = vpack.c.b16 %v602, %v601
        %v625 = vpack.c.b16 %v604, %v603
        %v626 = vpack.c.b16 %v606, %v605
        %v627 = vpack.c.b16 %v608, %v607
        %v628 = vpack.c.b16 %v610, %v609
        %v629 = vpack.c.b16 %v612, %v611
        %v630 = vpack.c.b16 %v614, %v613
        %647 = vmatpush.bf16.msra.mxu0 %v622
        %648 = vmatpush.bf16.msra.mxu0 %v621
        %649 = vmatpush.bf16.msra.mxu0 %v620
        %650 = vmatpush.bf16.msra.mxu0 %v619
        %651 = vmatpush.bf16.msra.mxu0 %v618
        %652 = vmatpush.bf16.msra.mxu0 %v617
        %653 = vmatpush.bf16.msra.mxu0 %v616
        %654 = vmatpush.bf16.msra.mxu0 %v615
        %655 = vmatmul.bf16.gmra.mxu0 %v487
        %v656 = vpop.f32.mrf.mxu0
        %v657 = vadd.f32 0.0, %v656
        %v658 = vpop.f32.mrf.mxu0
        %v659 = vadd.f32 0.0, %v658
        %660 = vmatmul.bf16.gmra.mxu0 %v489
        %v661 = vpop.f32.mrf.mxu0
        %v662 = vadd.f32 0.0, %v661
        %v663 = vpop.f32.mrf.mxu0
        %v664 = vadd.f32 0.0, %v663
        %665 = vmatmul.bf16.gmra.mxu0 %v491
        %v666 = vpop.f32.mrf.mxu0
        %v667 = vadd.f32 0.0, %v666
        %v668 = vpop.f32.mrf.mxu0
        %v669 = vadd.f32 0.0, %v668
        %670 = vmatmul.bf16.gmra.mxu0 %v493
        %v671 = vpop.f32.mrf.mxu0
        %v672 = vadd.f32 0.0, %v671
        %v673 = vpop.f32.mrf.mxu0
        %v674 = vadd.f32 0.0, %v673
        %675 = vmatmul.bf16.gmra.mxu0 %v495
        %v676 = vpop.f32.mrf.mxu0
        %v677 = vadd.f32 0.0, %v676
        %v678 = vpop.f32.mrf.mxu0
        %v679 = vadd.f32 0.0, %v678
        %680 = vmatmul.bf16.gmra.mxu0 %v497
        %v681 = vpop.f32.mrf.mxu0
        %v682 = vadd.f32 0.0, %v681
        %v683 = vpop.f32.mrf.mxu0
        %v684 = vadd.f32 0.0, %v683
        %685 = vmatmul.bf16.gmra.mxu0 %v499
        %v686 = vpop.f32.mrf.mxu0
        %v687 = vadd.f32 0.0, %v686
        %v688 = vpop.f32.mrf.mxu0
        %v689 = vadd.f32 0.0, %v688
        %690 = vmatmul.bf16.gmra.mxu0 %v501
        %v691 = vpop.f32.mrf.mxu0
        %v692 = vadd.f32 0.0, %v691
        %v693 = vpop.f32.mrf.mxu0
        %v694 = vadd.f32 0.0, %v693
        %695 = vmatmul.bf16.gmra.mxu0 %v503
        %v696 = vpop.f32.mrf.mxu0
        %v697 = vadd.f32 0.0, %v696
        %v698 = vpop.f32.mrf.mxu0
        %v699 = vadd.f32 0.0, %v698
        %700 = vmatmul.bf16.gmra.mxu0 %v505
        %v701 = vpop.f32.mrf.mxu0
        %v702 = vadd.f32 0.0, %v701
        %v703 = vpop.f32.mrf.mxu0
        %v704 = vadd.f32 0.0, %v703
        %705 = vmatmul.bf16.gmra.mxu0 %v507
        %v706 = vpop.f32.mrf.mxu0
        %v707 = vadd.f32 0.0, %v706
        %v708 = vpop.f32.mrf.mxu0
        %v709 = vadd.f32 0.0, %v708
        %710 = vmatmul.bf16.gmra.mxu0 %v509
        %v711 = vpop.f32.mrf.mxu0
        %v712 = vadd.f32 0.0, %v711
        %v713 = vpop.f32.mrf.mxu0
        %v714 = vadd.f32 0.0, %v713
        %715 = vmatmul.bf16.gmra.mxu0 %v511
        %v716 = vpop.f32.mrf.mxu0
        %v717 = vadd.f32 0.0, %v716
        %v718 = vpop.f32.mrf.mxu0
        %v719 = vadd.f32 0.0, %v718
        %720 = vmatmul.bf16.gmra.mxu0 %v513
        %v721 = vpop.f32.mrf.mxu0
        %v722 = vadd.f32 0.0, %v721
        %v723 = vpop.f32.mrf.mxu0
        %v724 = vadd.f32 0.0, %v723
        %725 = vmatmul.bf16.gmra.mxu0 %v515
        %v726 = vpop.f32.mrf.mxu0
        %v727 = vadd.f32 0.0, %v726
        %v728 = vpop.f32.mrf.mxu0
        %v729 = vadd.f32 0.0, %v728
        %730 = vmatmul.bf16.gmra.mxu0 %v517
        %v731 = vpop.f32.mrf.mxu0
        %v732 = vadd.f32 0.0, %v731
        %v733 = vpop.f32.mrf.mxu0
        %v734 = vadd.f32 0.0, %v733
        %735 = vdwg.mxu0
        %736 = vmatpush.bf16.msra.mxu0 %v630
        %737 = vmatpush.bf16.msra.mxu0 %v629
        %738 = vmatpush.bf16.msra.mxu0 %v628
        %739 = vmatpush.bf16.msra.mxu0 %v627
        %740 = vmatpush.bf16.msra.mxu0 %v626
        %741 = vmatpush.bf16.msra.mxu0 %v625
        %742 = vmatpush.bf16.msra.mxu0 %v624
        %743 = vmatpush.bf16.msra.mxu0 %v623
        %744 = vmatmul.bf16.gmra.mxu0 %v488
        %v745 = vpop.f32.mrf.mxu0
        %v746 = vadd.f32 %v657, %v745
        %v747 = vpop.f32.mrf.mxu0
        %v748 = vadd.f32 %v659, %v747
        %749 = vmatmul.bf16.gmra.mxu0 %v490
        %v750 = vpop.f32.mrf.mxu0
        %v751 = vadd.f32 %v662, %v750
        %v752 = vpop.f32.mrf.mxu0
        %v753 = vadd.f32 %v664, %v752
        %754 = vmatmul.bf16.gmra.mxu0 %v492
        %v755 = vpop.f32.mrf.mxu0
        %v756 = vadd.f32 %v667, %v755
        %v757 = vpop.f32.mrf.mxu0
        %v758 = vadd.f32 %v669, %v757
        %759 = vmatmul.bf16.gmra.mxu0 %v494
        %v760 = vpop.f32.mrf.mxu0
        %v761 = vadd.f32 %v672, %v760
        %v762 = vpop.f32.mrf.mxu0
        %v763 = vadd.f32 %v674, %v762
        %764 = vmatmul.bf16.gmra.mxu0 %v496
        %v765 = vpop.f32.mrf.mxu0
        %v766 = vadd.f32 %v677, %v765
        %v767 = vpop.f32.mrf.mxu0
        %v768 = vadd.f32 %v679, %v767
        %769 = vmatmul.bf16.gmra.mxu0 %v498
        %v770 = vpop.f32.mrf.mxu0
        %v771 = vadd.f32 %v682, %v770
        %v772 = vpop.f32.mrf.mxu0
        %v773 = vadd.f32 %v684, %v772
        %774 = vmatmul.bf16.gmra.mxu0 %v500
        %v775 = vpop.f32.mrf.mxu0
        %v776 = vadd.f32 %v687, %v775
        %v777 = vpop.f32.mrf.mxu0
        %v778 = vadd.f32 %v689, %v777
        %779 = vmatmul.bf16.gmra.mxu0 %v502
        %v780 = vpop.f32.mrf.mxu0
        %v781 = vadd.f32 %v692, %v780
        %v782 = vpop.f32.mrf.mxu0
        %v783 = vadd.f32 %v694, %v782
        %784 = vmatmul.bf16.gmra.mxu0 %v504
        %v785 = vpop.f32.mrf.mxu0
        %v786 = vadd.f32 %v697, %v785
        %v787 = vpop.f32.mrf.mxu0
        %v788 = vadd.f32 %v699, %v787
        %789 = vmatmul.bf16.gmra.mxu0 %v506
        %v790 = vpop.f32.mrf.mxu0
        %v791 = vadd.f32 %v702, %v790
        %v792 = vpop.f32.mrf.mxu0
        %v793 = vadd.f32 %v704, %v792
        %794 = vmatmul.bf16.gmra.mxu0 %v508
        %v795 = vpop.f32.mrf.mxu0
        %v796 = vadd.f32 %v707, %v795
        %v797 = vpop.f32.mrf.mxu0
        %v798 = vadd.f32 %v709, %v797
        %799 = vmatmul.bf16.gmra.mxu0 %v510
        %v800 = vpop.f32.mrf.mxu0
        %v801 = vadd.f32 %v712, %v800
        %v802 = vpop.f32.mrf.mxu0
        %v803 = vadd.f32 %v714, %v802
        %804 = vmatmul.bf16.gmra.mxu0 %v512
        %v805 = vpop.f32.mrf.mxu0
        %v806 = vadd.f32 %v717, %v805
        %v807 = vpop.f32.mrf.mxu0
        %v808 = vadd.f32 %v719, %v807
        %809 = vmatmul.bf16.gmra.mxu0 %v514
        %v810 = vpop.f32.mrf.mxu0
        %v811 = vadd.f32 %v722, %v810
        %v812 = vpop.f32.mrf.mxu0
        %v813 = vadd.f32 %v724, %v812
        %814 = vmatmul.bf16.gmra.mxu0 %v516
        %v815 = vpop.f32.mrf.mxu0
        %v816 = vadd.f32 %v727, %v815
        %v817 = vpop.f32.mrf.mxu0
        %v818 = vadd.f32 %v729, %v817
        %819 = vmatmul.bf16.gmra.mxu0 %v518
        %v820 = vpop.f32.mrf.mxu0
        %v821 = vadd.f32 %v732, %v820
        %v822 = vpop.f32.mrf.mxu0
        %v823 = vadd.f32 %v734, %v822
        %824 = vdwg.mxu0
        %v825 = vadd.f32 %v295, %v746
        %v826 = vadd.f32 %v296, %v748
        %v827 = vadd.f32 %v297, %v751
        %v828 = vadd.f32 %v298, %v753
        %v829 = vadd.f32 %v299, %v756
        %v830 = vadd.f32 %v300, %v758
        %v831 = vadd.f32 %v301, %v761
        %v832 = vadd.f32 %v302, %v763
        %v833 = vadd.f32 %v303, %v766
        %v834 = vadd.f32 %v304, %v768
        %v835 = vadd.f32 %v305, %v771
        %v836 = vadd.f32 %v306, %v773
        %v837 = vadd.f32 %v307, %v776
        %v838 = vadd.f32 %v308, %v778
        %v839 = vadd.f32 %v309, %v781
        %v840 = vadd.f32 %v310, %v783
        %v841 = vadd.f32 %v311, %v786
        %v842 = vadd.f32 %v312, %v788
        %v843 = vadd.f32 %v313, %v791
        %v844 = vadd.f32 %v314, %v793
        %v845 = vadd.f32 %v315, %v796
        %v846 = vadd.f32 %v316, %v798
        %v847 = vadd.f32 %v317, %v801
        %v848 = vadd.f32 %v318, %v803
        %v849 = vadd.f32 %v319, %v806
        %v850 = vadd.f32 %v320, %v808
        %v851 = vadd.f32 %v321, %v811
        %v852 = vadd.f32 %v322, %v813
        %v853 = vadd.f32 %v323, %v816
        %v854 = vadd.f32 %v324, %v818
        %v855 = vadd.f32 %v325, %v821
        %v856 = vadd.f32 %v326, %v823
        %857 = vst [vmem:[#allocation2] sm:$0xff] %v825
        %858 = vst [vmem:[#allocation2 + $0x8] sm:$0xff] %v826
        %859 = vst [vmem:[#allocation2 + $0x10] sm:$0xff] %v827
        %860 = vst [vmem:[#allocation2 + $0x18] sm:$0xff] %v828
        %861 = vst [vmem:[#allocation2 + $0x20] sm:$0xff] %v829
        %862 = vst [vmem:[#allocation2 + $0x28] sm:$0xff] %v830
        %863 = vst [vmem:[#allocation2 + $0x30] sm:$0xff] %v831
        %864 = vst [vmem:[#allocation2 + $0x38] sm:$0xff] %v832
        %865 = vst [vmem:[#allocation2 + $0x40] sm:$0xff] %v833
        %866 = vst [vmem:[#allocation2 + $0x48] sm:$0xff] %v834
        %867 = vst [vmem:[#allocation2 + $0x50] sm:$0xff] %v835
        %868 = vst [vmem:[#allocation2 + $0x58] sm:$0xff] %v836
        %869 = vst [vmem:[#allocation2 + $0x60] sm:$0xff] %v837
        %870 = vst [vmem:[#allocation2 + $0x68] sm:$0xff] %v838
        %871 = vst [vmem:[#allocation2 + $0x70] sm:$0xff] %v839
        %872 = vst [vmem:[#allocation2 + $0x78] sm:$0xff] %v840
        %873 = vst [vmem:[#allocation2 + $0x80] sm:$0xff] %v841
        %874 = vst [vmem:[#allocation2 + $0x88] sm:$0xff] %v842
        %875 = vst [vmem:[#allocation2 + $0x90] sm:$0xff] %v843
        %876 = vst [vmem:[#allocation2 + $0x98] sm:$0xff] %v844
        %877 = vst [vmem:[#allocation2 + $0xa0] sm:$0xff] %v845
        %878 = vst [vmem:[#allocation2 + $0xa8] sm:$0xff] %v846
        %879 = vst [vmem:[#allocation2 + $0xb0] sm:$0xff] %v847
        %880 = vst [vmem:[#allocation2 + $0xb8] sm:$0xff] %v848
        %881 = vst [vmem:[#allocation2 + $0xc0] sm:$0xff] %v849
        %882 = vst [vmem:[#allocation2 + $0xc8] sm:$0xff] %v850
        %883 = vst [vmem:[#allocation2 + $0xd0] sm:$0xff] %v851
        %884 = vst [vmem:[#allocation2 + $0xd8] sm:$0xff] %v852
        %885 = vst [vmem:[#allocation2 + $0xe0] sm:$0xff] %v853
        %886 = vst [vmem:[#allocation2 + $0xe8] sm:$0xff] %v854
        %887 = vst [vmem:[#allocation2 + $0xf0] sm:$0xff] %v855
        %888 = vst [vmem:[#allocation2 + $0xf8] sm:$0xff] %v856
        // Predicated region
        $region37: #{matmul_bias_act.1} parent=31 // pred_check
          %p889 = pneg %p259
        $region38: #{matmul_bias_act.1} parent=31 // pred_check_branch
          %891 = sbr.rel (%p889) target = $region40
        $region39: #{matmul_bias_act.1} parent=31 // pred_region
          %v892 = vld [vmem:[#allocation2] sm:$0xff]
          %v893 = vld [vmem:[#allocation2 + $0x8] sm:$0xff]
          %v894 = vld [vmem:[#allocation2 + $0x10] sm:$0xff]
          %v895 = vld [vmem:[#allocation2 + $0x18] sm:$0xff]
          %v896 = vld [vmem:[#allocation2 + $0x20] sm:$0xff]
          %v897 = vld [vmem:[#allocation2 + $0x28] sm:$0xff]
          %v898 = vld [vmem:[#allocation2 + $0x30] sm:$0xff]
          %v899 = vld [vmem:[#allocation2 + $0x38] sm:$0xff]
          %v900 = vld [vmem:[#allocation2 + $0x40] sm:$0xff]
          %v901 = vld [vmem:[#allocation2 + $0x48] sm:$0xff]
          %v902 = vld [vmem:[#allocation2 + $0x50] sm:$0xff]
          %v903 = vld [vmem:[#allocation2 + $0x58] sm:$0xff]
          %v904 = vld [vmem:[#allocation2 + $0x60] sm:$0xff]
          %v905 = vld [vmem:[#allocation2 + $0x68] sm:$0xff]
          %v906 = vld [vmem:[#allocation2 + $0x70] sm:$0xff]
          %v907 = vld [vmem:[#allocation2 + $0x78] sm:$0xff]
          %v908 = vld [vmem:[#allocation2 + $0x80] sm:$0xff]
          %v909 = vld [vmem:[#allocation2 + $0x88] sm:$0xff]
          %v910 = vld [vmem:[#allocation2 + $0x90] sm:$0xff]
          %v911 = vld [vmem:[#allocation2 + $0x98] sm:$0xff]
          %v912 = vld [vmem:[#allocation2 + $0xa0] sm:$0xff]
          %v913 = vld [vmem:[#allocation2 + $0xa8] sm:$0xff]
          %v914 = vld [vmem:[#allocation2 + $0xb0] sm:$0xff]
          %v915 = vld [vmem:[#allocation2 + $0xb8] sm:$0xff]
          %v916 = vld [vmem:[#allocation2 + $0xc0] sm:$0xff]
          %v917 = vld [vmem:[#allocation2 + $0xc8] sm:$0xff]
          %v918 = vld [vmem:[#allocation2 + $0xd0] sm:$0xff]
          %v919 = vld [vmem:[#allocation2 + $0xd8] sm:$0xff]
          %v920 = vld [vmem:[#allocation2 + $0xe0] sm:$0xff]
          %v921 = vld [vmem:[#allocation2 + $0xe8] sm:$0xff]
          %v922 = vld [vmem:[#allocation2 + $0xf0] sm:$0xff]
          %v923 = vld [vmem:[#allocation2 + $0xf8] sm:$0xff]
          %v924 = vld [vmem:[%s257] sm:$0x1]
          %v926 = vperm.slane %v924, 0
          %v928 = vadd.f32 %v892, %v926
          %v929 = vadd.f32 %v893, %v926
          %v930 = vadd.f32 %v894, %v926
          %v931 = vadd.f32 %v895, %v926
          %v932 = vadd.f32 %v896, %v926
          %v933 = vadd.f32 %v897, %v926
          %v934 = vadd.f32 %v898, %v926
          %v935 = vadd.f32 %v899, %v926
          %v936 = vadd.f32 %v900, %v926
          %v937 = vadd.f32 %v901, %v926
          %v938 = vadd.f32 %v902, %v926
          %v939 = vadd.f32 %v903, %v926
          %v940 = vadd.f32 %v904, %v926
          %v941 = vadd.f32 %v905, %v926
          %v942 = vadd.f32 %v906, %v926
          %v943 = vadd.f32 %v907, %v926
          %v944 = vadd.f32 %v908, %v926
          %v945 = vadd.f32 %v909, %v926
          %v946 = vadd.f32 %v910, %v926
          %v947 = vadd.f32 %v911, %v926
          %v948 = vadd.f32 %v912, %v926
          %v949 = vadd.f32 %v913, %v926
          %v950 = vadd.f32 %v914, %v926
          %v951 = vadd.f32 %v915, %v926
          %v952 = vadd.f32 %v916, %v926
          %v953 = vadd.f32 %v917, %v926
          %v954 = vadd.f32 %v918, %v926
          %v955 = vadd.f32 %v919, %v926
          %v956 = vadd.f32 %v920, %v926
          %v957 = vadd.f32 %v921, %v926
          %v958 = vadd.f32 %v922, %v926
          %v959 = vadd.f32 %v923, %v926
          %v960 = vmax.f32 %v928, 0.0
          %v961 = vmax.f32 %v929, 0.0
          %v962 = vmax.f32 %v930, 0.0
          %v963 = vmax.f32 %v931, 0.0
          %v964 = vmax.f32 %v932, 0.0
          %v965 = vmax.f32 %v933, 0.0
          %v966 = vmax.f32 %v934, 0.0
          %v967 = vmax.f32 %v935, 0.0
          %v968 = vmax.f32 %v936, 0.0
          %v969 = vmax.f32 %v937, 0.0
          %v970 = vmax.f32 %v938, 0.0
          %v971 = vmax.f32 %v939, 0.0
          %v972 = vmax.f32 %v940, 0.0
          %v973 = vmax.f32 %v941, 0.0
          %v974 = vmax.f32 %v942, 0.0
          %v975 = vmax.f32 %v943, 0.0
          %v976 = vmax.f32 %v944, 0.0
          %v977 = vmax.f32 %v945, 0.0
          %v978 = vmax.f32 %v946, 0.0
          %v979 = vmax.f32 %v947, 0.0
          %v980 = vmax.f32 %v948, 0.0
          %v981 = vmax.f32 %v949, 0.0
          %v982 = vmax.f32 %v950, 0.0
          %v983 = vmax.f32 %v951, 0.0
          %v984 = vmax.f32 %v952, 0.0
          %v985 = vmax.f32 %v953, 0.0
          %v986 = vmax.f32 %v954, 0.0
          %v987 = vmax.f32 %v955, 0.0
          %v988 = vmax.f32 %v956, 0.0
          %v989 = vmax.f32 %v957, 0.0
          %v990 = vmax.f32 %v958, 0.0
          %v991 = vmax.f32 %v959, 0.0
          %v992 = vpack.c.bf16 %v960, %v960
          %v993 = vpack.c.bf16 %v961, %v961
          %v994 = vpack.c.bf16 %v962, %v962
          %v995 = vpack.c.bf16 %v963, %v963
          %v996 = vpack.c.bf16 %v964, %v964
          %v997 = vpack.c.bf16 %v965, %v965
          %v998 = vpack.c.bf16 %v966, %v966
          %v999 = vpack.c.bf16 %v967, %v967
          %v1000 = vpack.c.bf16 %v968, %v968
          %v1001 = vpack.c.bf16 %v969, %v969
          %v1002 = vpack.c.bf16 %v970, %v970
          %v1003 = vpack.c.bf16 %v971, %v971
          %v1004 = vpack.c.bf16 %v972, %v972
          %v1005 = vpack.c.bf16 %v973, %v973
          %v1006 = vpack.c.bf16 %v974, %v974
          %v1007 = vpack.c.bf16 %v975, %v975
          %v1008 = vpack.c.bf16 %v976, %v976
          %v1009 = vpack.c.bf16 %v977, %v977
          %v1010 = vpack.c.bf16 %v978, %v978
          %v1011 = vpack.c.bf16 %v979, %v979
          %v1012 = vpack.c.bf16 %v980, %v980
          %v1013 = vpack.c.bf16 %v981, %v981
          %v1014 = vpack.c.bf16 %v982, %v982
          %v1015 = vpack.c.bf16 %v983, %v983
          %v1016 = vpack.c.bf16 %v984, %v984
          %v1017 = vpack.c.bf16 %v985, %v985
          %v1018 = vpack.c.bf16 %v986, %v986
          %v1019 = vpack.c.bf16 %v987, %v987
          %v1020 = vpack.c.bf16 %v988, %v988
          %v1021 = vpack.c.bf16 %v989, %v989
          %v1022 = vpack.c.bf16 %v990, %v990
          %v1023 = vpack.c.bf16 %v991, %v991
          %1024 = vst [vmem:[%s233] sm:$0xf] %v992
          %1025 = vst [vmem:[%s233 + $0x4] sm:$0xf] %v993
          %1026 = vst [vmem:[%s233 + $0x8] sm:$0xf] %v994
          %1027 = vst [vmem:[%s233 + $0xc] sm:$0xf] %v995
          %1028 = vst [vmem:[%s233 + $0x10] sm:$0xf] %v996
          %1029 = vst [vmem:[%s233 + $0x14] sm:$0xf] %v997
          %1030 = vst [vmem:[%s233 + $0x18] sm:$0xf] %v998
          %1031 = vst [vmem:[%s233 + $0x1c] sm:$0xf] %v999
          %1032 = vst [vmem:[%s233 + $0x20] sm:$0xf] %v1000
          %1033 = vst [vmem:[%s233 + $0x24] sm:$0xf] %v1001
          %1034 = vst [vmem:[%s233 + $0x28] sm:$0xf] %v1002
          %1035 = vst [vmem:[%s233 + $0x2c] sm:$0xf] %v1003
          %1036 = vst [vmem:[%s233 + $0x30] sm:$0xf] %v1004
          %1037 = vst [vmem:[%s233 + $0x34] sm:$0xf] %v1005
          %1038 = vst [vmem:[%s233 + $0x38] sm:$0xf] %v1006
          %1039 = vst [vmem:[%s233 + $0x3c] sm:$0xf] %v1007
          %1040 = vst [vmem:[%s233 + $0x40] sm:$0xf] %v1008
          %1041 = vst [vmem:[%s233 + $0x44] sm:$0xf] %v1009
          %1042 = vst [vmem:[%s233 + $0x48] sm:$0xf] %v1010
          %1043 = vst [vmem:[%s233 + $0x4c] sm:$0xf] %v1011
          %1044 = vst [vmem:[%s233 + $0x50] sm:$0xf] %v1012
          %1045 = vst [vmem:[%s233 + $0x54] sm:$0xf] %v1013
          %1046 = vst [vmem:[%s233 + $0x58] sm:$0xf] %v1014
          %1047 = vst [vmem:[%s233 + $0x5c] sm:$0xf] %v1015
          %1048 = vst [vmem:[%s233 + $0x60] sm:$0xf] %v1016
          %1049 = vst [vmem:[%s233 + $0x64] sm:$0xf] %v1017
          %1050 = vst [vmem:[%s233 + $0x68] sm:$0xf] %v1018
          %1051 = vst [vmem:[%s233 + $0x6c] sm:$0xf] %v1019
          %1052 = vst [vmem:[%s233 + $0x70] sm:$0xf] %v1020
          %1053 = vst [vmem:[%s233 + $0x74] sm:$0xf] %v1021
          %1054 = vst [vmem:[%s233 + $0x78] sm:$0xf] %v1022
          %1055 = vst [vmem:[%s233 + $0x7c] sm:$0xf] %v1023
        $region40: #{matmul_bias_act.1} parent=31 // pred_fallthru
          _
        %s1056 = sand.u32 %s128, 1
        %s1057 = scalar_lea.sflag [#allocation4], %s1056
        %s1058 = sand.u32 %s128, 1
        %s1059 = smul.addr %s1058, 128
        %s1060 = scalar_lea.vmem [#allocation3], %s1059
        // Predicated region
        $region41: #{matmul_bias_act.1} parent=31 // pred_check
          %p1061 = pneg %p138
        $region42: #{matmul_bias_act.1} parent=31 // pred_check_branch
          %1063 = sbr.rel (%p1061) target = $region44
        $region43: #{matmul_bias_act.1} parent=31 // pred_region
          %s1064 = smul.u32 32, %s22
          %1066 = vsyncadd %s1057, 0
          %s1067 = sadd.s32 %s23, %s1064
          %s1068 = smul.addr %s1067, 4
          %s1069 = scalar_lea.hbm %s3, %s1068
          %s1070 = sshll.u32 %s1060, 4
          %s1071 = int_to_ptr.vmem [resolvable:$true] %s1070
          %s1072 = sshll.u32 %s1069, 4
          %s1073 = int_to_ptr.hbm [resolvable:$true] %s1072
          %1078 = dma.vmem_to_hbm [thread:$0]  %s1071, 2048, %s1073, %s1057, 64, 64, 4
        $region44: #{matmul_bias_act.1} parent=31 // pred_fallthru
          _
      $region32: #{matmul_bias_act.1} parent=5 // pred_fallthru
        _
      %p1079 = scmp.le.s32.totalorder 2, %s12
      // Predicated region
      $region45: #{matmul_bias_act.1} parent=5 // pred_check
        %p1080 = pneg %p1079
      $region46: #{matmul_bias_act.1} parent=5 // pred_check_branch
        %1082 = sbr.rel (%p1080) target = $region48
      $region47: #{matmul_bias_act.1} parent=5 // pred_region
        %s1083 = ssub.s32 %s12, 2
        // Predicated region
        $region49: #{matmul_bias_act.1} parent=47 // pred_check
          %p1084 = pneg %p144
        $region50: #{matmul_bias_act.1} parent=47 // pred_check_branch
          %1086 = sbr.rel (%p1084) target = $region52
        $region51: #{matmul_bias_act.1} parent=47 // pred_region
          %s1087 = sand.u32 %s129, 1
          %s1088 = scalar_lea.sflag [#allocation4], %s1087
          %s1089 = sand.u32 %s129, 1
          %s1090 = smul.addr %s1089, 128
          %s1091 = scalar_lea.vmem [#allocation3], %s1090
          %1093 = dma.done %s1088, 2048
        $region52: #{matmul_bias_act.1} parent=47 // pred_fallthru
          _
      $region48: #{matmul_bias_act.1} parent=5 // pred_fallthru
        _
    $region6: #{matmul_bias_act.1} parent=1 // loop_footer
      %s16 = sadd.s32 1, %s12
    $region7: #{matmul_bias_act.1} parent=1 // loop_footer_branch
      %11 = sbr.rel target = $region3
    $region8: #{matmul_bias_act.1} parent=1 // loop_exit
      _
    %1094 = vsyncpa [#allocation4], 1
    %s1095 = scalar_lea.sflag [#allocation4], 1
    %1096 = vsyncpa %s1095, 1

</llo_original>
